<compile_context>
chip_gen: v7x
topology: tpu7x:2x2x1
jax: 0.10.0
libtpu: 0.0.40
codegen_flags: <defaults>
</compile_context>

<pallas_src>
import jax
import jax.numpy as jnp
from jax import lax
from jax.experimental import pallas as pl
from jax.experimental.pallas import tpu as pltpu


def _cross_attention_kernel(q_ref, k_ref, v_ref,
                            wq_ref, wk_ref, wv_ref, wp_ref,
                            bq_ref, bk_ref, bv_ref, bp_ref,
                            out_ref, acc_ref):
    h = pl.program_id(2)

    @pl.when(h == 0)
    def _init():
        acc_ref[...] = jnp.zeros_like(acc_ref)

    q = q_ref[0]          # (tq, E)  bf16
    k = k_ref[0]          # (Tk, E)  bf16
    v = v_ref[0]          # (Tk, E)  bf16

    # Per-head projections: weights arrive pre-transposed as (E, hs) blocks, so
    # this is a plain x @ Wt MXU matmul with f32 accumulation; bias added in f32.
    # The attention scale is already folded into wq/bq on the host.
    qh = jnp.dot(q, wq_ref[0], preferred_element_type=jnp.float32) + bq_ref[0]  # (tq, hs)
    kh = jnp.dot(k, wk_ref[0], preferred_element_type=jnp.float32) + bk_ref[0]  # (Tk, hs)
    vh = jnp.dot(v, wv_ref[0], preferred_element_type=jnp.float32) + bv_ref[0]  # (Tk, hs)

    # Scores: contract head dims of q and k directly (no kh.T materialization).
    scores = lax.dot_general(
        qh.astype(jnp.bfloat16), kh.astype(jnp.bfloat16),
        dimension_numbers=(((1,), (1,)), ((), ())),
        preferred_element_type=jnp.float32)                       # (tq, Tk) f32

    # Numerically-stable softmax in f32; normalization deferred past the AV matmul.
    scores = scores - jnp.max(scores, axis=-1, keepdims=True)
    e = jnp.exp(scores)
    inv_denom = pl.reciprocal(jnp.sum(e, axis=-1, keepdims=True), approx=True)

    o_h = jnp.dot(e.astype(jnp.bfloat16), vh.astype(jnp.bfloat16),
                  preferred_element_type=jnp.float32) * inv_denom  # (tq, hs)

    # Accumulate this head's slice of the output projection (replaces concat).
    acc_ref[...] += jnp.dot(o_h.astype(jnp.bfloat16), wp_ref[0],
                            preferred_element_type=jnp.float32)

    @pl.when(h == pl.num_programs(2) - 1)
    def _finalize():
        out_ref[0] = (acc_ref[...] + bp_ref[...]).astype(out_ref.dtype)


def cross_attention(q, k, v, params, *, n_heads, block_q=128):
    """q: (B, Tq, E), k/v: (B, Tk, E). Returns (B, Tq, E) in q.dtype."""
    B, Tq, E = q.shape
    Tk = k.shape[1]
    assert E % n_heads == 0
    hs = E // n_heads
    scale = float(hs) ** (-0.5)
    out_dtype = q.dtype

    wq, bq, wk, bk, wv, bv, wp, bp = params

    # --- Host-side weight preparation (hoisted out of the kernel) -----------
    # Per-head, pre-transposed input-projection weights: (H, E, hs) with
    #   w_heads[h] == W.T[:, h*hs:(h+1)*hs], so x_proj_h = x @ w_heads[h] + b_h.
    def head_major_t(w):
        return jnp.transpose(w.reshape(n_heads, hs, E), (0, 2, 1))

    wq_h = head_major_t(wq * scale).astype(jnp.bfloat16)   # scale folded into Q proj
    wk_h = head_major_t(wk).astype(jnp.bfloat16)
    wv_h = head_major_t(wv).astype(jnp.bfloat16)
    bq_h = (bq * scale).reshape(n_heads, 1, hs).astype(jnp.float32)
    bk_h = bk.reshape(n_heads, 1, hs).astype(jnp.float32)
    bv_h = bv.reshape(n_heads, 1, hs).astype(jnp.float32)

    # Output projection split per head: out = sum_h o_h @ Wp.T[h*hs:(h+1)*hs, :] + bp
    wp_h = wp.T.reshape(n_heads, hs, E).astype(jnp.bfloat16)
    bp2 = bp.reshape(1, E).astype(jnp.float32)

    # bf16 activations for the MXU (also halves activation DMA bytes).
    qb = q.astype(jnp.bfloat16)
    kb = k.astype(jnp.bfloat16)
    vb = v.astype(jnp.bfloat16)

    tq = min(Tq, block_q)
    nq = pl.cdiv(Tq, tq)
    grid = (B, nq, n_heads)

    q_spec = pl.BlockSpec((1, tq, E), lambda b, i, h: (b, i, 0))
    kv_spec = pl.BlockSpec((1, Tk, E), lambda b, i, h: (b, 0, 0))
    w_in_spec = pl.BlockSpec((1, E, hs), lambda b, i, h: (h, 0, 0))
    b_in_spec = pl.BlockSpec((1, 1, hs), lambda b, i, h: (h, 0, 0))
    wp_spec = pl.BlockSpec((1, hs, E), lambda b, i, h: (h, 0, 0))
    bp_spec = pl.BlockSpec((1, E), lambda b, i, h: (0, 0))
    out_spec = pl.BlockSpec((1, tq, E), lambda b, i, h: (b, i, 0))

    return pl.pallas_call(
        _cross_attention_kernel,
        out_shape=jax.ShapeDtypeStruct((B, Tq, E), out_dtype),
        grid_spec=pltpu.PrefetchScalarGridSpec(
            num_scalar_prefetch=0,
            grid=grid,
            in_specs=[q_spec, kv_spec, kv_spec,
                      w_in_spec, w_in_spec, w_in_spec, wp_spec,
                      b_in_spec, b_in_spec, b_in_spec, bp_spec],
            out_specs=out_spec,
            scratch_shapes=[pltpu.VMEM((tq, E), jnp.float32)],
        ),
        compiler_params=pltpu.CompilerParams(
            dimension_semantics=("parallel", "parallel", "arbitrary"),
            vmem_limit_bytes=48 * 1024 * 1024,
        ),
    )(qb, kb, vb, wq_h, wk_h, wv_h, wp_h, bq_h, bk_h, bv_h, bp2)


def init_params(key, embed_dim):
    """Match module._init_weights: weight ~ N(0, 0.02), bias = 0."""
    ks = jax.random.split(key, 4)
    def lin(k):
        w = 0.02 * jax.random.normal(k, (embed_dim, embed_dim), dtype=jnp.float32)
        b = jnp.zeros((embed_dim,), dtype=jnp.float32)
        return w, b
    wq, bq = lin(ks[0]); wk, bk = lin(ks[1]); wv, bv = lin(ks[2]); wp, bp = lin(ks[3])
    return (wq, bq, wk, bk, wv, bv, wp, bp)


def _reference(q, k, v, params, n_heads):
    """Pure-JAX f32 reference mirroring the PyTorch forward (eval mode)."""
    wq, bq, wk, bk, wv, bv, wp, bp = params
    B, Tq, E = q.shape
    hs = E // n_heads
    scale = hs ** (-0.5)
    def proj(x, w, b):
        return x @ w.T + b
    def split(x):  # (B, T, E) -> (B, H, T, hs)
        B_, T_, _ = x.shape
        return x.reshape(B_, T_, n_heads, hs).transpose(0, 2, 1, 3)
    qh, kh, vh = split(proj(q, wq, bq)), split(proj(k, wk, bk)), split(proj(v, wv, bv))
    att = jnp.einsum('bhqd,bhkd->bhqk', qh, kh) * scale
    att = jax.nn.softmax(att, axis=-1)
    o = jnp.einsum('bhqk,bhkd->bhqd', att, vh)
    o = o.transpose(0, 2, 1, 3).reshape(B, Tq, E)
    return proj(o, wp, bp)


if __name__ == "__main__":
    # Config: embed_dim=32, num_heads=4, seq_len=8, batch=2 (kv seq = 8 too).
    B, Tq, Tk, E, H = 2, 8, 8, 32, 4

    key = jax.random.PRNGKey(0)
    kq, kk, kv, kw = jax.random.split(key, 4)
    q = jax.random.normal(kq, (B, Tq, E), dtype=jnp.float32)
    k = jax.random.normal(kk, (B, Tk, E), dtype=jnp.float32)
    v = jax.random.normal(kv, (B, Tk, E), dtype=jnp.float32)
    params = init_params(kw, E)

    out = cross_attention(q, k, v, params, n_heads=H)
    out = jax.block_until_ready(out)

    ref = _reference(q, k, v, params, H)
    assert out.shape == (B, Tq, E)
    err = float(jnp.max(jnp.abs(out - ref)))
    # bf16 MXU inputs + approx reciprocal -> compare with bf16-level tolerance.
    assert jnp.allclose(out, ref, atol=2e-2, rtol=2e-2), f"mismatch vs reference (max abs err {err})"

    print("KERNEL_OK")
</pallas_src>

<mosaic_0001>
module attributes {stable_mosaic.version = 11 : i64} {
  func.func @_cross_attention_kernel(%arg0: i32, %arg1: i32, %arg2: i32, %arg3: memref<1x8x32xbf16, #tpu.memory_space<vmem>>, %arg4: memref<1x8x32xbf16, #tpu.memory_space<vmem>>, %arg5: memref<1x8x32xbf16, #tpu.memory_space<vmem>>, %arg6: memref<1x32x8xbf16, #tpu.memory_space<vmem>>, %arg7: memref<1x32x8xbf16, #tpu.memory_space<vmem>>, %arg8: memref<1x32x8xbf16, #tpu.memory_space<vmem>>, %arg9: memref<1x8x32xbf16, #tpu.memory_space<vmem>>, %arg10: memref<1x1x8xf32, #tpu.memory_space<vmem>>, %arg11: memref<1x1x8xf32, #tpu.memory_space<vmem>>, %arg12: memref<1x1x8xf32, #tpu.memory_space<vmem>>, %arg13: memref<1x32xf32, #tpu.memory_space<vmem>>, %arg14: memref<1x8x32xf32, #tpu.memory_space<vmem>>, %arg15: memref<8x32xf32, #tpu.memory_space<vmem>>) attributes {dimension_semantics = [#tpu.dimension_semantics<parallel>, #tpu.dimension_semantics<parallel>, #tpu.dimension_semantics<arbitrary>], iteration_bounds = array<i64: 2, 1, 4>, scalar_prefetch = 0 : i64, scratch_operands = 1 : i64, tpu.core_type = #tpu.core_type<tc>, window_params = [{transform_indices = @transform_0, window_bounds = array<i64: 1, 8, 32>}, {transform_indices = @transform_1, window_bounds = array<i64: 1, 8, 32>}, {transform_indices = @transform_2, window_bounds = array<i64: 1, 8, 32>}, {transform_indices = @transform_3, window_bounds = array<i64: 1, 32, 8>}, {transform_indices = @transform_4, window_bounds = array<i64: 1, 32, 8>}, {transform_indices = @transform_5, window_bounds = array<i64: 1, 32, 8>}, {transform_indices = @transform_6, window_bounds = array<i64: 1, 8, 32>}, {transform_indices = @transform_7, window_bounds = array<i64: 1, 1, 8>}, {transform_indices = @transform_8, window_bounds = array<i64: 1, 1, 8>}, {transform_indices = @transform_9, window_bounds = array<i64: 1, 1, 8>}, {pipeline_mode = #tpu.pipeline_mode<synchronous>, transform_indices = @transform_10, window_bounds = array<i64: 1, 32>}, {transform_indices = @transform_11, window_bounds = array<i64: 1, 8, 32>}]} {
    %c0_i32 = arith.constant 0 : i32
    %0 = arith.cmpi eq, %arg2, %c0_i32 : i32
    %1 = arith.extui %0 : i1 to i32
    %c0_i32_0 = arith.constant 0 : i32
    %2 = arith.cmpi ne, %1, %c0_i32_0 : i32
    scf.if %2 {
      %cst_42 = arith.constant 0.000000e+00 : f32
      %56 = vector.broadcast %cst_42 : f32 to vector<8x32xf32>
      %c0_43 = arith.constant 0 : index
      %c0_44 = arith.constant 0 : index
      %57 = vector.load %arg15[%c0_43, %c0_44] : memref<8x32xf32, #tpu.memory_space<vmem>>, vector<8x32xf32>
      tpu.vector_store %arg15[%c0_43, %c0_44], %56 {strides = array<i32>} : memref<8x32xf32, #tpu.memory_space<vmem>>, vector<8x32xf32>,
    } else {
    }
    %c0 = arith.constant 0 : index
    %c0_1 = arith.constant 0 : index
    %c0_2 = arith.constant 0 : index
    %3 = vector.load %arg3[%c0, %c0_1, %c0_2] : memref<1x8x32xbf16, #tpu.memory_space<vmem>>, vector<1x8x32xbf16>
    %4 = vector.shape_cast %3 : vector<1x8x32xbf16> to vector<8x32xbf16>
    %c0_3 = arith.constant 0 : index
    %c0_4 = arith.constant 0 : index
    %c0_5 = arith.constant 0 : index
    %5 = vector.load %arg4[%c0_3, %c0_4, %c0_5] : memref<1x8x32xbf16, #tpu.memory_space<vmem>>, vector<1x8x32xbf16>
    %6 = vector.shape_cast %5 : vector<1x8x32xbf16> to vector<8x32xbf16>
    %c0_6 = arith.constant 0 : index
    %c0_7 = arith.constant 0 : index
    %c0_8 = arith.constant 0 : index
    %7 = vector.load %arg5[%c0_6, %c0_7, %c0_8] : memref<1x8x32xbf16, #tpu.memory_space<vmem>>, vector<1x8x32xbf16>
    %8 = vector.shape_cast %7 : vector<1x8x32xbf16> to vector<8x32xbf16>
    %c0_9 = arith.constant 0 : index
    %c0_10 = arith.constant 0 : index
    %c0_11 = arith.constant 0 : index
    %9 = vector.load %arg6[%c0_9, %c0_10, %c0_11] : memref<1x32x8xbf16, #tpu.memory_space<vmem>>, vector<1x32x8xbf16>
    %10 = vector.shape_cast %9 : vector<1x32x8xbf16> to vector<32x8xbf16>
    %cst = arith.constant dense<0.000000e+00> : vector<8x8xf32>
    %11 = tpu.matmul %4, %10, %cst {dimension_numbers = #tpu.dot_dimension_numbers<[1], [0], [0], [1], [0, 0, 1, 1], [], []>} : vector<8x32xbf16>, vector<32x8xbf16>, vector<8x8xf32> -> vector<8x8xf32>
    %c0_12 = arith.constant 0 : index
    %c0_13 = arith.constant 0 : index
    %c0_14 = arith.constant 0 : index
    %12 = vector.load %arg10[%c0_12, %c0_13, %c0_14] : memref<1x1x8xf32, #tpu.memory_space<vmem>>, vector<1x1x8xf32>
    %13 = vector.shape_cast %12 : vector<1x1x8xf32> to vector<1x8xf32>
    %14 = vector.broadcast %13 : vector<1x8xf32> to vector<8x8xf32>
    %15 = arith.addf %11, %14 : vector<8x8xf32>
    %c0_15 = arith.constant 0 : index
    %c0_16 = arith.constant 0 : index
    %c0_17 = arith.constant 0 : index
    %16 = vector.load %arg7[%c0_15, %c0_16, %c0_17] : memref<1x32x8xbf16, #tpu.memory_space<vmem>>, vector<1x32x8xbf16>
    %17 = vector.shape_cast %16 : vector<1x32x8xbf16> to vector<32x8xbf16>
    %cst_18 = arith.constant dense<0.000000e+00> : vector<8x8xf32>
    %18 = tpu.matmul %6, %17, %cst_18 {dimension_numbers = #tpu.dot_dimension_numbers<[1], [0], [0], [1], [0, 0, 1, 1], [], []>} : vector<8x32xbf16>, vector<32x8xbf16>, vector<8x8xf32> -> vector<8x8xf32>
    %c0_19 = arith.constant 0 : index
    %c0_20 = arith.constant 0 : index
    %c0_21 = arith.constant 0 : index
    %19 = vector.load %arg11[%c0_19, %c0_20, %c0_21] : memref<1x1x8xf32, #tpu.memory_space<vmem>>, vector<1x1x8xf32>
    %20 = vector.shape_cast %19 : vector<1x1x8xf32> to vector<1x8xf32>
    %21 = vector.broadcast %20 : vector<1x8xf32> to vector<8x8xf32>
    %22 = arith.addf %18, %21 : vector<8x8xf32>
    %c0_22 = arith.constant 0 : index
    %c0_23 = arith.constant 0 : index
    %c0_24 = arith.constant 0 : index
    %23 = vector.load %arg8[%c0_22, %c0_23, %c0_24] : memref<1x32x8xbf16, #tpu.memory_space<vmem>>, vector<1x32x8xbf16>
    %24 = vector.shape_cast %23 : vector<1x32x8xbf16> to vector<32x8xbf16>
    %cst_25 = arith.constant dense<0.000000e+00> : vector<8x8xf32>
    %25 = tpu.matmul %8, %24, %cst_25 {dimension_numbers = #tpu.dot_dimension_numbers<[1], [0], [0], [1], [0, 0, 1, 1], [], []>} : vector<8x32xbf16>, vector<32x8xbf16>, vector<8x8xf32> -> vector<8x8xf32>
    %c0_26 = arith.constant 0 : index
    %c0_27 = arith.constant 0 : index
    %c0_28 = arith.constant 0 : index
    %26 = vector.load %arg12[%c0_26, %c0_27, %c0_28] : memref<1x1x8xf32, #tpu.memory_space<vmem>>, vector<1x1x8xf32>
    %27 = vector.shape_cast %26 : vector<1x1x8xf32> to vector<1x8xf32>
    %28 = vector.broadcast %27 : vector<1x8xf32> to vector<8x8xf32>
    %29 = arith.addf %25, %28 : vector<8x8xf32>
    %30 = arith.truncf %15 : vector<8x8xf32> to vector<8x8xbf16>
    %31 = arith.truncf %22 : vector<8x8xf32> to vector<8x8xbf16>
    %cst_29 = arith.constant dense<0.000000e+00> : vector<8x8xf32>
    %32 = tpu.matmul %30, %31, %cst_29 {dimension_numbers = #tpu.dot_dimension_numbers<[1], [1], [0], [0], [0, 0, 1, 0], [], []>} : vector<8x8xbf16>, vector<8x8xbf16>, vector<8x8xf32> -> vector<8x8xf32>
    %cst_30 = arith.constant dense<0xFF800000> : vector<8xf32>
    %33 = vector.multi_reduction <maximumf>, %32, %cst_30 [1] : vector<8x8xf32> to vector<8xf32>
    %34 = vector.shape_cast %33 : vector<8xf32> to vector<8x1xf32>
    %35 = vector.broadcast %34 : vector<8x1xf32> to vector<8x8xf32>
    %36 = arith.subf %32, %35 : vector<8x8xf32>
    %37 = math.exp %36 : vector<8x8xf32>
    %cst_31 = arith.constant dense<0.000000e+00> : vector<8xf32>
    %38 = vector.multi_reduction <add>, %37, %cst_31 [1] : vector<8x8xf32> to vector<8xf32>
    %39 = vector.shape_cast %38 : vector<8xf32> to vector<8x1xf32>
    %40 = tpu.reciprocal %39 {approx = true} : vector<8x1xf32> -> vector<8x1xf32>
    %41 = arith.truncf %37 : vector<8x8xf32> to vector<8x8xbf16>
    %42 = arith.truncf %29 : vector<8x8xf32> to vector<8x8xbf16>
    %cst_32 = arith.constant dense<0.000000e+00> : vector<8x8xf32>
    %43 = tpu.matmul %41, %42, %cst_32 {dimension_numbers = #tpu.dot_dimension_numbers<[1], [0], [0], [1], [0, 0, 1, 1], [], []>} : vector<8x8xbf16>, vector<8x8xbf16>, vector<8x8xf32> -> vector<8x8xf32>
    %44 = vector.broadcast %40 : vector<8x1xf32> to vector<8x8xf32>
    %45 = arith.mulf %43, %44 : vector<8x8xf32>
    %c0_33 = arith.constant 0 : index
    %c0_34 = arith.constant 0 : index
    %46 = vector.load %arg15[%c0_33, %c0_34] : memref<8x32xf32, #tpu.memory_space<vmem>>, vector<8x32xf32>
    %47 = arith.truncf %45 : vector<8x8xf32> to vector<8x8xbf16>
    %c0_35 = arith.constant 0 : index
    %c0_36 = arith.constant 0 : index
    %c0_37 = arith.constant 0 : index
    %48 = vector.load %arg9[%c0_35, %c0_36, %c0_37] : memref<1x8x32xbf16, #tpu.memory_space<vmem>>, vector<1x8x32xbf16>
    %49 = vector.shape_cast %48 : vector<1x8x32xbf16> to vector<8x32xbf16>
    %cst_38 = arith.constant dense<0.000000e+00> : vector<8x32xf32>
    %50 = tpu.matmul %47, %49, %cst_38 {dimension_numbers = #tpu.dot_dimension_numbers<[1], [0], [0], [1], [0, 0, 1, 1], [], []>} : vector<8x8xbf16>, vector<8x32xbf16>, vector<8x32xf32> -> vector<8x32xf32>
    %51 = arith.addf %46, %50 : vector<8x32xf32>
    %c0_39 = arith.constant 0 : index
    %c0_40 = arith.constant 0 : index
    %52 = vector.load %arg15[%c0_39, %c0_40] : memref<8x32xf32, #tpu.memory_space<vmem>>, vector<8x32xf32>
    tpu.vector_store %arg15[%c0_39, %c0_40], %51 {strides = array<i32>} : memref<8x32xf32, #tpu.memory_space<vmem>>, vector<8x32xf32>,
    %c3_i32 = arith.constant 3 : i32
    %53 = arith.cmpi eq, %arg2, %c3_i32 : i32
    %54 = arith.extui %53 : i1 to i32
    %c0_i32_41 = arith.constant 0 : i32
    %55 = arith.cmpi ne, %54, %c0_i32_41 : i32
    scf.if %55 {
      %c0_42 = arith.constant 0 : index
      %c0_43 = arith.constant 0 : index
      %56 = vector.load %arg15[%c0_42, %c0_43] : memref<8x32xf32, #tpu.memory_space<vmem>>, vector<8x32xf32>
      %c0_44 = arith.constant 0 : index
      %c0_45 = arith.constant 0 : index
      %57 = vector.load %arg13[%c0_44, %c0_45] : memref<1x32xf32, #tpu.memory_space<vmem>>, vector<1x32xf32>
      %58 = vector.broadcast %57 : vector<1x32xf32> to vector<8x32xf32>
      %59 = arith.addf %56, %58 : vector<8x32xf32>
      %c0_46 = arith.constant 0 : index
      %c0_47 = arith.constant 0 : index
      %c0_48 = arith.constant 0 : index
      %60 = vector.load %arg14[%c0_46, %c0_47, %c0_48] : memref<1x8x32xf32, #tpu.memory_space<vmem>>, vector<1x8x32xf32>
      %61 = vector.shape_cast %60 : vector<1x8x32xf32> to vector<8x32xf32>
      %62 = vector.shape_cast %59 : vector<8x32xf32> to vector<1x8x32xf32>
      tpu.vector_store %arg14[%c0_46, %c0_47, %c0_48], %62 {strides = array<i32>} : memref<1x8x32xf32, #tpu.memory_space<vmem>>, vector<1x8x32xf32>,
    } else {
    }
    return
  }
  func.func @transform_0(%arg0: i32, %arg1: i32, %arg2: i32) -> (i32, i32, i32) {
    %c0_i32 = arith.constant 0 : i32
    %c0_i32_0 = arith.constant 0 : i32
    return %arg0, %arg1, %c0_i32 : i32, i32, i32
  }
  func.func @transform_1(%arg0: i32, %arg1: i32, %arg2: i32) -> (i32, i32, i32) {
    %c0_i32 = arith.constant 0 : i32
    %c0_i32_0 = arith.constant 0 : i32
    %c0_i32_1 = arith.constant 0 : i32
    return %arg0, %c0_i32, %c0_i32_0 : i32, i32, i32
  }
  func.func @transform_2(%arg0: i32, %arg1: i32, %arg2: i32) -> (i32, i32, i32) {
    %c0_i32 = arith.constant 0 : i32
    %c0_i32_0 = arith.constant 0 : i32
    %c0_i32_1 = arith.constant 0 : i32
    return %arg0, %c0_i32, %c0_i32_0 : i32, i32, i32
  }
  func.func @transform_3(%arg0: i32, %arg1: i32, %arg2: i32) -> (i32, i32, i32) {
    %c0_i32 = arith.constant 0 : i32
    %c0_i32_0 = arith.constant 0 : i32
    %c0_i32_1 = arith.constant 0 : i32
    return %arg2, %c0_i32, %c0_i32_0 : i32, i32, i32
  }
  func.func @transform_4(%arg0: i32, %arg1: i32, %arg2: i32) -> (i32, i32, i32) {
    %c0_i32 = arith.constant 0 : i32
    %c0_i32_0 = arith.constant 0 : i32
    %c0_i32_1 = arith.constant 0 : i32
    return %arg2, %c0_i32, %c0_i32_0 : i32, i32, i32
  }
  func.func @transform_5(%arg0: i32, %arg1: i32, %arg2: i32) -> (i32, i32, i32) {
    %c0_i32 = arith.constant 0 : i32
    %c0_i32_0 = arith.constant 0 : i32
    %c0_i32_1 = arith.constant 0 : i32
    return %arg2, %c0_i32, %c0_i32_0 : i32, i32, i32
  }
  func.func @transform_6(%arg0: i32, %arg1: i32, %arg2: i32) -> (i32, i32, i32) {
    %c0_i32 = arith.constant 0 : i32
    %c0_i32_0 = arith.constant 0 : i32
    %c0_i32_1 = arith.constant 0 : i32
    return %arg2, %c0_i32, %c0_i32_0 : i32, i32, i32
  }
  func.func @transform_7(%arg0: i32, %arg1: i32, %arg2: i32) -> (i32, i32, i32) {
    %c0_i32 = arith.constant 0 : i32
    %c0_i32_0 = arith.constant 0 : i32
    %c0_i32_1 = arith.constant 0 : i32
    return %arg2, %c0_i32, %c0_i32_0 : i32, i32, i32
  }
  func.func @transform_8(%arg0: i32, %arg1: i32, %arg2: i32) -> (i32, i32, i32) {
    %c0_i32 = arith.constant 0 : i32
    %c0_i32_0 = arith.constant 0 : i32
    %c0_i32_1 = arith.constant 0 : i32
    return %arg2, %c0_i32, %c0_i32_0 : i32, i32, i32
  }
  func.func @transform_9(%arg0: i32, %arg1: i32, %arg2: i32) -> (i32, i32, i32) {
    %c0_i32 = arith.constant 0 : i32
    %c0_i32_0 = arith.constant 0 : i32
    %c0_i32_1 = arith.constant 0 : i32
    return %arg2, %c0_i32, %c0_i32_0 : i32, i32, i32
  }
  func.func @transform_10(%arg0: i32, %arg1: i32, %arg2: i32) -> (i32, i32) {
    %c0_i32 = arith.constant 0 : i32
    %c0_i32_0 = arith.constant 0 : i32
    %c0_i32_1 = arith.constant 0 : i32
    return %c0_i32, %c0_i32_0 : i32, i32
  }
  func.func @transform_11(%arg0: i32, %arg1: i32, %arg2: i32) -> (i32, i32, i32) {
    %c0_i32 = arith.constant 0 : i32
    %c0_i32_0 = arith.constant 0 : i32
    return %arg0, %arg1, %c0_i32 : i32, i32, i32
  }
}

</mosaic_0001>

<llo_original>
// kernel: tpu_custom_call.1
$region0: #{tpu_custom_call.1}
  #allocation0 [shape = 'u32[]', space=smem, size = 0x4, offset = 0x4, fixed_abs, tag = 'smem constant byte address 0x4 - core index']
  #allocation1 [shape = 'u32[144,128]{1,0:T(1,128)}', space=vmem, size = 0x12000, scoped, tag = 'internal scratch']
  #allocation2 [shape = 'f32[8,32]{1,0:T(8,128)}', space=vmem, size = 0x1000, scoped, tag = 'scratch operand']
  %s0 = inlined_call_operand.vmem [shape: bf16[2,8,32], index: 0, kind: input, shape index: {}]
  %s1 = inlined_call_operand.vmem [shape: bf16[2,8,32], index: 1, kind: input, shape index: {}]
  %s2 = inlined_call_operand.vmem [shape: bf16[2,8,32], index: 2, kind: input, shape index: {}]
  %s3 = inlined_call_operand.vmem [shape: bf16[4,32,8], index: 3, kind: input, shape index: {}]
  %s4 = inlined_call_operand.vmem [shape: bf16[4,32,8], index: 4, kind: input, shape index: {}]
  %s5 = inlined_call_operand.vmem [shape: bf16[4,32,8], index: 5, kind: input, shape index: {}]
  %s6 = inlined_call_operand.vmem [shape: bf16[4,8,32], index: 6, kind: input, shape index: {}]
  %s7 = inlined_call_operand.vmem [shape: f32[4,1,8], index: 7, kind: input, shape index: {}]
  %s8 = inlined_call_operand.vmem [shape: f32[4,1,8], index: 8, kind: input, shape index: {}]
  %s9 = inlined_call_operand.vmem [shape: f32[4,1,8], index: 9, kind: input, shape index: {}]
  %s10 = inlined_call_operand.vmem [shape: f32[1,32], index: 10, kind: input, shape index: {}]
  %s11 = inlined_call_operand.hbm [shape: f32[2,8,32], index: 11, kind: output, shape index: {}]
  %s12 = sld [smem:[#allocation0]]
  $region85: #{tpu_custom_call.1} parent=0
    _
  %s14 = ssub.s32 1, %s12
  %s15 = scalar_select 0, %s14, %s12
  $region1: #{tpu_custom_call.1} parent=0
    #allocation3 [shape = 'u8[8192]{0}', space=vmem, size = 0x2000, scoped, tag = 'output window, operand 0']
    #allocation4 [shape = 's32[2]{0}', space=sflag, size = 0x8, scoped, tag = 'scoped memory for tpu_custom_call.1']
    %16 = vsyncpa [#allocation4], 0
    %s17 = scalar_lea.sflag [#allocation4], 1
    %18 = vsyncpa %s17, 0
    loop: start=0, step=1, limit=10
    $region2: #{tpu_custom_call.1} parent=1 // loop_pre_header
      _
    $region3: #{tpu_custom_call.1} parent=1 // loop_header
      %s20 = sphi 0, %s24
      %p21 = scmp.ge.s32.totalorder %s20, 10
      %s27 = sphi 0, %s46
      %s28 = sphi 0, %s42
      %s29 = sphi 0, %s38
      %s30 = sphi 0, %s27
      %s31 = sphi 0, %s28
      %s32 = sphi 0, %s29
      %s33 = sphi 0, %s30
      %s34 = sphi 0, %s31
      %s35 = sphi 0, %s32
      %s51 = sphi 0, %s53
      %s54 = sphi 0, %s51
      %s55 = sphi 0, %s54
      %s71 = sphi 0, %s55
      %s77 = sphi 0, %s79
      %s80 = sphi 0, %s77
      %s81 = sphi 0, %s80
      %s97 = sphi 0, %s81
      %s103 = sphi 0, %s105
      %s106 = sphi 0, %s103
      %s107 = sphi 0, %s106
      %s123 = sphi 0, %s107
      %s129 = sphi 0, %s131
      %s132 = sphi 0, %s129
      %s133 = sphi 0, %s132
      %s149 = sphi 0, %s133
      %s155 = sphi 0, %s157
      %s158 = sphi 0, %s155
      %s159 = sphi 0, %s158
      %s175 = sphi 0, %s159
      %s181 = sphi 0, %s183
      %s184 = sphi 0, %s181
      %s185 = sphi 0, %s184
      %s201 = sphi 0, %s185
      %s207 = sphi 0, %s209
      %s210 = sphi 0, %s207
      %s211 = sphi 0, %s210
      %s227 = sphi 0, %s211
      %s233 = sphi 0, %s235
      %s236 = sphi 0, %s233
      %s237 = sphi 0, %s236
      %s253 = sphi 0, %s237
      %s259 = sphi 0, %s261
      %s262 = sphi 0, %s259
      %s263 = sphi 0, %s262
      %s279 = sphi 0, %s263
      %s285 = sphi 0, %s287
      %s288 = sphi 0, %s285
      %s289 = sphi 0, %s288
      %s305 = sphi 0, %s289
      %s309 = sphi 0, %s309
      %s311 = sphi 0, %s309
      %s312 = sphi 0, %s311
      %s326 = sphi 0, %s312
      %s334 = sphi 0, %s336
      %s337 = sphi 0, %s334
      %s338 = sphi 0, %s337
      %s354 = sphi 0, %s338
    $region4: #{tpu_custom_call.1} parent=1 // loop_header_branch
      %23 = sbr.rel (%p21) target = $region8
    $region5: #{tpu_custom_call.1} parent=1 // loop_body
      %s25 = ssub.s32 %s20, 1
      %s26 = ssub.s32 %s20, 2
      %s36 = sadd.s32 1, %s29
      %p37 = scmp.ge.s32.totalorder %s36, 4
      %s38 = scalar_select %p37, 0, %s36
      %s39 = sadd.s32 1, %s28
      %s40 = scalar_select %p37, %s39, %s28
      %p41 = scmp.ge.s32.totalorder %s40, 1
      %s42 = scalar_select %p41, 0, %s40
      %s43 = sadd.s32 1, %s27
      %s44 = scalar_select %p41, %s43, %s27
      %p45 = scmp.ge.s32.totalorder %s44, 2
      %s46 = scalar_select %p45, 0, %s44
      %s47 = ssub.s32 %s27, %s46
      %s48 = ssub.s32 %s28, %s42
      %s49 = sor.u32 %s47, %s48
      %p50 = scmp.eq.s32.totalorder %s49, 0
      %s52 = sadd.s32 %s51, 1
      %s53 = scalar_select %p50, %s51, %s52
      %p56 = pneg %p50
      %p57 = scmp.eq.s32.totalorder %s20, 7
      %p58 = por %p56, %p57
      %p59 = scmp.ne.s32.totalorder %s51, %s54
      %p60 = scmp.eq.s32.totalorder %s20, 0
      %p61 = por %p59, %p60
      %p62 = scmp.ne.s32.totalorder %s51, %s54
      %p63 = scmp.eq.s32.totalorder %s25, 7
      %p64 = por %p62, %p63
      %p65 = scmp.ne.s32.totalorder %s54, %s55
      %p66 = scmp.eq.s32.totalorder %s25, 0
      %p67 = por %p65, %p66
      %p68 = scmp.ne.s32.totalorder %s54, %s55
      %p69 = scmp.eq.s32.totalorder %s26, 7
      %p70 = por %p68, %p69
      %p72 = scmp.ne.s32.totalorder %s55, %s71
      %p73 = scmp.eq.s32.totalorder %s26, 0
      %p74 = por %p72, %p73
      %s75 = ssub.s32 %s27, %s46
      %p76 = scmp.eq.s32.totalorder %s75, 0
      %s78 = sadd.s32 %s77, 1
      %s79 = scalar_select %p76, %s77, %s78
      %p82 = pneg %p76
      %p83 = scmp.eq.s32.totalorder %s20, 7
      %p84 = por %p82, %p83
      %p85 = scmp.ne.s32.totalorder %s77, %s80
      %p86 = scmp.eq.s32.totalorder %s20, 0
      %p87 = por %p85, %p86
      %p88 = scmp.ne.s32.totalorder %s77, %s80
      %p89 = scmp.eq.s32.totalorder %s25, 7
      %p90 = por %p88, %p89
      %p91 = scmp.ne.s32.totalorder %s80, %s81
      %p92 = scmp.eq.s32.totalorder %s25, 0
      %p93 = por %p91, %p92
      %p94 = scmp.ne.s32.totalorder %s80, %s81
      %p95 = scmp.eq.s32.totalorder %s26, 7
      %p96 = por %p94, %p95
      %p98 = scmp.ne.s32.totalorder %s81, %s97
      %p99 = scmp.eq.s32.totalorder %s26, 0
      %p100 = por %p98, %p99
      %s101 = ssub.s32 %s27, %s46
      %p102 = scmp.eq.s32.totalorder %s101, 0
      %s104 = sadd.s32 %s103, 1
      %s105 = scalar_select %p102, %s103, %s104
      %p108 = pneg %p102
      %p109 = scmp.eq.s32.totalorder %s20, 7
      %p110 = por %p108, %p109
      %p111 = scmp.ne.s32.totalorder %s103, %s106
      %p112 = scmp.eq.s32.totalorder %s20, 0
      %p113 = por %p111, %p112
      %p114 = scmp.ne.s32.totalorder %s103, %s106
      %p115 = scmp.eq.s32.totalorder %s25, 7
      %p116 = por %p114, %p115
      %p117 = scmp.ne.s32.totalorder %s106, %s107
      %p118 = scmp.eq.s32.totalorder %s25, 0
      %p119 = por %p117, %p118
      %p120 = scmp.ne.s32.totalorder %s106, %s107
      %p121 = scmp.eq.s32.totalorder %s26, 7
      %p122 = por %p120, %p121
      %p124 = scmp.ne.s32.totalorder %s107, %s123
      %p125 = scmp.eq.s32.totalorder %s26, 0
      %p126 = por %p124, %p125
      %s127 = ssub.s32 %s29, %s38
      %p128 = scmp.eq.s32.totalorder %s127, 0
      %s130 = sadd.s32 %s129, 1
      %s131 = scalar_select %p128, %s129, %s130
      %p134 = pneg %p128
      %p135 = scmp.eq.s32.totalorder %s20, 7
      %p136 = por %p134, %p135
      %p137 = scmp.ne.s32.totalorder %s129, %s132
      %p138 = scmp.eq.s32.totalorder %s20, 0
      %p139 = por %p137, %p138
      %p140 = scmp.ne.s32.totalorder %s129, %s132
      %p141 = scmp.eq.s32.totalorder %s25, 7
      %p142 = por %p140, %p141
      %p143 = scmp.ne.s32.totalorder %s132, %s133
      %p144 = scmp.eq.s32.totalorder %s25, 0
      %p145 = por %p143, %p144
      %p146 = scmp.ne.s32.totalorder %s132, %s133
      %p147 = scmp.eq.s32.totalorder %s26, 7
      %p148 = por %p146, %p147
      %p150 = scmp.ne.s32.totalorder %s133, %s149
      %p151 = scmp.eq.s32.totalorder %s26, 0
      %p152 = por %p150, %p151
      %s153 = ssub.s32 %s29, %s38
      %p154 = scmp.eq.s32.totalorder %s153, 0
      %s156 = sadd.s32 %s155, 1
      %s157 = scalar_select %p154, %s155, %s156
      %p160 = pneg %p154
      %p161 = scmp.eq.s32.totalorder %s20, 7
      %p162 = por %p160, %p161
      %p163 = scmp.ne.s32.totalorder %s155, %s158
      %p164 = scmp.eq.s32.totalorder %s20, 0
      %p165 = por %p163, %p164
      %p166 = scmp.ne.s32.totalorder %s155, %s158
      %p167 = scmp.eq.s32.totalorder %s25, 7
      %p168 = por %p166, %p167
      %p169 = scmp.ne.s32.totalorder %s158, %s159
      %p170 = scmp.eq.s32.totalorder %s25, 0
      %p171 = por %p169, %p170
      %p172 = scmp.ne.s32.totalorder %s158, %s159
      %p173 = scmp.eq.s32.totalorder %s26, 7
      %p174 = por %p172, %p173
      %p176 = scmp.ne.s32.totalorder %s159, %s175
      %p177 = scmp.eq.s32.totalorder %s26, 0
      %p178 = por %p176, %p177
      %s179 = ssub.s32 %s29, %s38
      %p180 = scmp.eq.s32.totalorder %s179, 0
      %s182 = sadd.s32 %s181, 1
      %s183 = scalar_select %p180, %s181, %s182
      %p186 = pneg %p180
      %p187 = scmp.eq.s32.totalorder %s20, 7
      %p188 = por %p186, %p187
      %p189 = scmp.ne.s32.totalorder %s181, %s184
      %p190 = scmp.eq.s32.totalorder %s20, 0
      %p191 = por %p189, %p190
      %p192 = scmp.ne.s32.totalorder %s181, %s184
      %p193 = scmp.eq.s32.totalorder %s25, 7
      %p194 = por %p192, %p193
      %p195 = scmp.ne.s32.totalorder %s184, %s185
      %p196 = scmp.eq.s32.totalorder %s25, 0
      %p197 = por %p195, %p196
      %p198 = scmp.ne.s32.totalorder %s184, %s185
      %p199 = scmp.eq.s32.totalorder %s26, 7
      %p200 = por %p198, %p199
      %p202 = scmp.ne.s32.totalorder %s185, %s201
      %p203 = scmp.eq.s32.totalorder %s26, 0
      %p204 = por %p202, %p203
      %s205 = ssub.s32 %s29, %s38
      %p206 = scmp.eq.s32.totalorder %s205, 0
      %s208 = sadd.s32 %s207, 1
      %s209 = scalar_select %p206, %s207, %s208
      %p212 = pneg %p206
      %p213 = scmp.eq.s32.totalorder %s20, 7
      %p214 = por %p212, %p213
      %p215 = scmp.ne.s32.totalorder %s207, %s210
      %p216 = scmp.eq.s32.totalorder %s20, 0
      %p217 = por %p215, %p216
      %p218 = scmp.ne.s32.totalorder %s207, %s210
      %p219 = scmp.eq.s32.totalorder %s25, 7
      %p220 = por %p218, %p219
      %p221 = scmp.ne.s32.totalorder %s210, %s211
      %p222 = scmp.eq.s32.totalorder %s25, 0
      %p223 = por %p221, %p222
      %p224 = scmp.ne.s32.totalorder %s210, %s211
      %p225 = scmp.eq.s32.totalorder %s26, 7
      %p226 = por %p224, %p225
      %p228 = scmp.ne.s32.totalorder %s211, %s227
      %p229 = scmp.eq.s32.totalorder %s26, 0
      %p230 = por %p228, %p229
      %s231 = ssub.s32 %s29, %s38
      %p232 = scmp.eq.s32.totalorder %s231, 0
      %s234 = sadd.s32 %s233, 1
      %s235 = scalar_select %p232, %s233, %s234
      %p238 = pneg %p232
      %p239 = scmp.eq.s32.totalorder %s20, 7
      %p240 = por %p238, %p239
      %p241 = scmp.ne.s32.totalorder %s233, %s236
      %p242 = scmp.eq.s32.totalorder %s20, 0
      %p243 = por %p241, %p242
      %p244 = scmp.ne.s32.totalorder %s233, %s236
      %p245 = scmp.eq.s32.totalorder %s25, 7
      %p246 = por %p244, %p245
      %p247 = scmp.ne.s32.totalorder %s236, %s237
      %p248 = scmp.eq.s32.totalorder %s25, 0
      %p249 = por %p247, %p248
      %p250 = scmp.ne.s32.totalorder %s236, %s237
      %p251 = scmp.eq.s32.totalorder %s26, 7
      %p252 = por %p250, %p251
      %p254 = scmp.ne.s32.totalorder %s237, %s253
      %p255 = scmp.eq.s32.totalorder %s26, 0
      %p256 = por %p254, %p255
      %s257 = ssub.s32 %s29, %s38
      %p258 = scmp.eq.s32.totalorder %s257, 0
      %s260 = sadd.s32 %s259, 1
      %s261 = scalar_select %p258, %s259, %s260
      %p264 = pneg %p258
      %p265 = scmp.eq.s32.totalorder %s20, 7
      %p266 = por %p264, %p265
      %p267 = scmp.ne.s32.totalorder %s259, %s262
      %p268 = scmp.eq.s32.totalorder %s20, 0
      %p269 = por %p267, %p268
      %p270 = scmp.ne.s32.totalorder %s259, %s262
      %p271 = scmp.eq.s32.totalorder %s25, 7
      %p272 = por %p270, %p271
      %p273 = scmp.ne.s32.totalorder %s262, %s263
      %p274 = scmp.eq.s32.totalorder %s25, 0
      %p275 = por %p273, %p274
      %p276 = scmp.ne.s32.totalorder %s262, %s263
      %p277 = scmp.eq.s32.totalorder %s26, 7
      %p278 = por %p276, %p277
      %p280 = scmp.ne.s32.totalorder %s263, %s279
      %p281 = scmp.eq.s32.totalorder %s26, 0
      %p282 = por %p280, %p281
      %s283 = ssub.s32 %s29, %s38
      %p284 = scmp.eq.s32.totalorder %s283, 0
      %s286 = sadd.s32 %s285, 1
      %s287 = scalar_select %p284, %s285, %s286
      %p290 = pneg %p284
      %p291 = scmp.eq.s32.totalorder %s20, 7
      %p292 = por %p290, %p291
      %p293 = scmp.ne.s32.totalorder %s285, %s288
      %p294 = scmp.eq.s32.totalorder %s20, 0
      %p295 = por %p293, %p294
      %p296 = scmp.ne.s32.totalorder %s285, %s288
      %p297 = scmp.eq.s32.totalorder %s25, 7
      %p298 = por %p296, %p297
      %p299 = scmp.ne.s32.totalorder %s288, %s289
      %p300 = scmp.eq.s32.totalorder %s25, 0
      %p301 = por %p299, %p300
      %p302 = scmp.ne.s32.totalorder %s288, %s289
      %p303 = scmp.eq.s32.totalorder %s26, 7
      %p304 = por %p302, %p303
      %p306 = scmp.ne.s32.totalorder %s289, %s305
      %p307 = scmp.eq.s32.totalorder %s26, 0
      %p308 = por %p306, %p307
      %s310 = sadd.s32 %s309, 1
      %p313 = scmp.eq.s32.totalorder %s20, 7
      %p314 = scmp.ne.s32.totalorder %s309, %s311
      %p315 = scmp.eq.s32.totalorder %s20, 0
      %p316 = por %p314, %p315
      %p317 = scmp.ne.s32.totalorder %s309, %s311
      %p318 = scmp.eq.s32.totalorder %s25, 7
      %p319 = por %p317, %p318
      %p320 = scmp.ne.s32.totalorder %s311, %s312
      %p321 = scmp.eq.s32.totalorder %s25, 0
      %p322 = por %p320, %p321
      %p323 = scmp.ne.s32.totalorder %s311, %s312
      %p324 = scmp.eq.s32.totalorder %s26, 7
      %p325 = por %p323, %p324
      %p327 = scmp.ne.s32.totalorder %s312, %s326
      %p328 = scmp.eq.s32.totalorder %s26, 0
      %p329 = por %p327, %p328
      %s330 = ssub.s32 %s27, %s46
      %s331 = ssub.s32 %s28, %s42
      %s332 = sor.u32 %s330, %s331
      %p333 = scmp.eq.s32.totalorder %s332, 0
      %s335 = sadd.s32 %s334, 1
      %s336 = scalar_select %p333, %s334, %s335
      %p339 = pneg %p333
      %p340 = scmp.eq.s32.totalorder %s20, 7
      %p341 = por %p339, %p340
      %p342 = scmp.ne.s32.totalorder %s334, %s337
      %p343 = scmp.eq.s32.totalorder %s20, 0
      %p344 = por %p342, %p343
      %p345 = scmp.ne.s32.totalorder %s334, %s337
      %p346 = scmp.eq.s32.totalorder %s25, 7
      %p347 = por %p345, %p346
      %p348 = scmp.ne.s32.totalorder %s337, %s338
      %p349 = scmp.eq.s32.totalorder %s25, 0
      %p350 = por %p348, %p349
      %p351 = scmp.ne.s32.totalorder %s337, %s338
      %p352 = scmp.eq.s32.totalorder %s26, 7
      %p353 = por %p351, %p352
      %p355 = scmp.ne.s32.totalorder %s338, %s354
      %p356 = scmp.eq.s32.totalorder %s26, 0
      %p357 = por %p355, %p356
      %p358 = scmp.le.s32.totalorder 1, %s20
      %p359 = scmp.lt.s32.totalorder %s20, 9
      %p360 = pnand %p358, %p359
      %p361 = pneg %p360
      // Predicated region
      $region9: #{tpu_custom_call.1} parent=5 // pred_check
        _
      $region10: #{tpu_custom_call.1} parent=5 // pred_check_branch
        %363 = sbr.rel (%p360) target = $region12
      $region11: #{tpu_custom_call.1} parent=5 // pred_region
        %s364 = ssub.s32 %s20, 1
        // Predicated region
        $region13: #{tpu_custom_call.1} parent=11 // pred_check
          %p365 = pneg %p322
        $region14: #{tpu_custom_call.1} parent=11 // pred_check_branch
          %367 = sbr.rel (%p365) target = $region16
        $region15: #{tpu_custom_call.1} parent=11 // pred_region
          _
        $region16: #{tpu_custom_call.1} parent=11 // pred_fallthru
          _
      $region12: #{tpu_custom_call.1} parent=5 // pred_fallthru
        _
      %p368 = scmp.lt.s32.totalorder %s20, 8
      // Predicated region
      $region17: #{tpu_custom_call.1} parent=5 // pred_check
        %p369 = pneg %p368
      $region18: #{tpu_custom_call.1} parent=5 // pred_check_branch
        %371 = sbr.rel (%p369) target = $region20
      $region19: #{tpu_custom_call.1} parent=5 // pred_region
        // Predicated region
        $region21: #{tpu_custom_call.1} parent=19 // pred_check
          %p372 = pneg %p61
        $region22: #{tpu_custom_call.1} parent=19 // pred_check_branch
          %374 = sbr.rel (%p372) target = $region24
        $region23: #{tpu_custom_call.1} parent=19 // pred_region
          %p375 = scmp.lt.s32.totalorder %s27, 1
          %s376 = scalar_select %p375, %s27, 1
          %p377 = scmp.lt.s32.totalorder %s28, 0
          %s378 = scalar_select %p377, %s28, 0
          %s379 = sadd.s32 %s378, %s376
          %s380 = smul.addr %s379, 4
          %s381 = scalar_lea.vmem %s0, %s380
        $region24: #{tpu_custom_call.1} parent=19 // pred_fallthru
          _
        // Predicated region
        $region25: #{tpu_custom_call.1} parent=19 // pred_check
          %p382 = pneg %p87
        $region26: #{tpu_custom_call.1} parent=19 // pred_check_branch
          %384 = sbr.rel (%p382) target = $region28
        $region27: #{tpu_custom_call.1} parent=19 // pred_region
          %p385 = scmp.lt.s32.totalorder %s27, 1
          %s386 = scalar_select %p385, %s27, 1
          %s387 = smul.addr %s386, 4
          %s388 = scalar_lea.vmem %s1, %s387
        $region28: #{tpu_custom_call.1} parent=19 // pred_fallthru
          _
        // Predicated region
        $region29: #{tpu_custom_call.1} parent=19 // pred_check
          %p389 = pneg %p113
        $region30: #{tpu_custom_call.1} parent=19 // pred_check_branch
          %391 = sbr.rel (%p389) target = $region32
        $region31: #{tpu_custom_call.1} parent=19 // pred_region
          %p392 = scmp.lt.s32.totalorder %s27, 1
          %s393 = scalar_select %p392, %s27, 1
          %s394 = smul.addr %s393, 4
          %s395 = scalar_lea.vmem %s2, %s394
        $region32: #{tpu_custom_call.1} parent=19 // pred_fallthru
          _
        // Predicated region
        $region33: #{tpu_custom_call.1} parent=19 // pred_check
          %p396 = pneg %p139
        $region34: #{tpu_custom_call.1} parent=19 // pred_check_branch
          %398 = sbr.rel (%p396) target = $region36
        $region35: #{tpu_custom_call.1} parent=19 // pred_region
          %p399 = scmp.lt.s32.totalorder %s29, 3
          %s400 = scalar_select %p399, %s29, 3
          %s401 = smul.addr %s400, 4
          %s402 = smul.addr %s401, 4
          %s403 = scalar_lea.vmem %s3, %s402
        $region36: #{tpu_custom_call.1} parent=19 // pred_fallthru
          _
        // Predicated region
        $region37: #{tpu_custom_call.1} parent=19 // pred_check
          %p404 = pneg %p165
        $region38: #{tpu_custom_call.1} parent=19 // pred_check_branch
          %406 = sbr.rel (%p404) target = $region40
        $region39: #{tpu_custom_call.1} parent=19 // pred_region
          %p407 = scmp.lt.s32.totalorder %s29, 3
          %s408 = scalar_select %p407, %s29, 3
          %s409 = smul.addr %s408, 4
          %s410 = smul.addr %s409, 4
          %s411 = scalar_lea.vmem %s4, %s410
        $region40: #{tpu_custom_call.1} parent=19 // pred_fallthru
          _
        // Predicated region
        $region41: #{tpu_custom_call.1} parent=19 // pred_check
          %p412 = pneg %p191
        $region42: #{tpu_custom_call.1} parent=19 // pred_check_branch
          %414 = sbr.rel (%p412) target = $region44
        $region43: #{tpu_custom_call.1} parent=19 // pred_region
          %p415 = scmp.lt.s32.totalorder %s29, 3
          %s416 = scalar_select %p415, %s29, 3
          %s417 = smul.addr %s416, 4
          %s418 = smul.addr %s417, 4
          %s419 = scalar_lea.vmem %s5, %s418
        $region44: #{tpu_custom_call.1} parent=19 // pred_fallthru
          _
        // Predicated region
        $region45: #{tpu_custom_call.1} parent=19 // pred_check
          %p420 = pneg %p217
        $region46: #{tpu_custom_call.1} parent=19 // pred_check_branch
          %422 = sbr.rel (%p420) target = $region48
        $region47: #{tpu_custom_call.1} parent=19 // pred_region
          %p423 = scmp.lt.s32.totalorder %s29, 3
          %s424 = scalar_select %p423, %s29, 3
          %s425 = smul.addr %s424, 4
          %s426 = scalar_lea.vmem %s6, %s425
        $region48: #{tpu_custom_call.1} parent=19 // pred_fallthru
          _
        // Predicated region
        $region49: #{tpu_custom_call.1} parent=19 // pred_check
          %p427 = pneg %p243
        $region50: #{tpu_custom_call.1} parent=19 // pred_check_branch
          %429 = sbr.rel (%p427) target = $region52
        $region51: #{tpu_custom_call.1} parent=19 // pred_region
          %p430 = scmp.lt.s32.totalorder %s29, 3
          %s431 = scalar_select %p430, %s29, 3
          %s432 = scalar_lea.vmem %s7, %s431
        $region52: #{tpu_custom_call.1} parent=19 // pred_fallthru
          _
        // Predicated region
        $region53: #{tpu_custom_call.1} parent=19 // pred_check
          %p433 = pneg %p269
        $region54: #{tpu_custom_call.1} parent=19 // pred_check_branch
          %435 = sbr.rel (%p433) target = $region56
        $region55: #{tpu_custom_call.1} parent=19 // pred_region
          %p436 = scmp.lt.s32.totalorder %s29, 3
          %s437 = scalar_select %p436, %s29, 3
          %s438 = scalar_lea.vmem %s8, %s437
        $region56: #{tpu_custom_call.1} parent=19 // pred_fallthru
          _
        // Predicated region
        $region57: #{tpu_custom_call.1} parent=19 // pred_check
          %p439 = pneg %p295
        $region58: #{tpu_custom_call.1} parent=19 // pred_check_branch
          %441 = sbr.rel (%p439) target = $region60
        $region59: #{tpu_custom_call.1} parent=19 // pred_region
          %p442 = scmp.lt.s32.totalorder %s29, 3
          %s443 = scalar_select %p442, %s29, 3
          %s444 = scalar_lea.vmem %s9, %s443
        $region60: #{tpu_custom_call.1} parent=19 // pred_fallthru
          _
      $region20: #{tpu_custom_call.1} parent=5 // pred_fallthru
        _
      %p445 = scmp.le.s32.totalorder 1, %s20
      %p446 = scmp.lt.s32.totalorder %s20, 9
      %p447 = pnand %p445, %p446
      %p448 = pneg %p447
      // Predicated region
      $region61: #{tpu_custom_call.1} parent=5 // pred_check
        _
      $region62: #{tpu_custom_call.1} parent=5 // pred_check_branch
        %450 = sbr.rel (%p447) target = $region64
      $region63: #{tpu_custom_call.1} parent=5 // pred_region
        %s451 = ssub.s32 %s20, 1
        %p452 = scmp.lt.s32.totalorder %s30, 1
        %s453 = scalar_select %p452, %s30, 1
        %p454 = scmp.lt.s32.totalorder %s31, 0
        %s455 = scalar_select %p454, %s31, 0
        %s456 = sadd.s32 %s455, %s453
        %s457 = smul.addr %s456, 4
        %s458 = scalar_lea.vmem %s0, %s457
        %p459 = pneg %p67
        %p460 = pneg %p64
        %p461 = scmp.lt.s32.totalorder %s30, 1
        %s462 = scalar_select %p461, %s30, 1
        %s463 = smul.addr %s462, 4
        %s464 = scalar_lea.vmem %s1, %s463
        %p465 = pneg %p93
        %p466 = pneg %p90
        %p467 = scmp.lt.s32.totalorder %s30, 1
        %s468 = scalar_select %p467, %s30, 1
        %s469 = smul.addr %s468, 4
        %s470 = scalar_lea.vmem %s2, %s469
        %p471 = pneg %p119
        %p472 = pneg %p116
        %p473 = scmp.lt.s32.totalorder %s32, 3
        %s474 = scalar_select %p473, %s32, 3
        %s475 = smul.addr %s474, 4
        %s476 = smul.addr %s475, 4
        %s477 = scalar_lea.vmem %s3, %s476
        %p478 = pneg %p145
        %p479 = pneg %p142
        %p480 = scmp.lt.s32.totalorder %s32, 3
        %s481 = scalar_select %p480, %s32, 3
        %s482 = smul.addr %s481, 4
        %s483 = smul.addr %s482, 4
        %s484 = scalar_lea.vmem %s4, %s483
        %p485 = pneg %p171
        %p486 = pneg %p168
        %p487 = scmp.lt.s32.totalorder %s32, 3
        %s488 = scalar_select %p487, %s32, 3
        %s489 = smul.addr %s488, 4
        %s490 = smul.addr %s489, 4
        %s491 = scalar_lea.vmem %s5, %s490
        %p492 = pneg %p197
        %p493 = pneg %p194
        %p494 = scmp.lt.s32.totalorder %s32, 3
        %s495 = scalar_select %p494, %s32, 3
        %s496 = smul.addr %s495, 4
        %s497 = scalar_lea.vmem %s6, %s496
        %p498 = pneg %p223
        %p499 = pneg %p220
        %p500 = scmp.lt.s32.totalorder %s32, 3
        %s501 = scalar_select %p500, %s32, 3
        %s502 = scalar_lea.vmem %s7, %s501
        %p503 = pneg %p249
        %p504 = pneg %p246
        %p505 = scmp.lt.s32.totalorder %s32, 3
        %s506 = scalar_select %p505, %s32, 3
        %s507 = scalar_lea.vmem %s8, %s506
        %p508 = pneg %p275
        %p509 = pneg %p272
        %p510 = scmp.lt.s32.totalorder %s32, 3
        %s511 = scalar_select %p510, %s32, 3
        %s512 = scalar_lea.vmem %s9, %s511
        %p513 = pneg %p301
        %p514 = pneg %p298
        %p515 = pneg %p322
        %p516 = pneg %p319
        %p517 = pneg %p350
        %p518 = pneg %p347
        %s519 = sand.u32 %s337, 1
        %s520 = scalar_lea.sflag [#allocation4], %s519
        %s521 = sand.u32 %s337, 1
        %s522 = smul.addr %s521, 8
        %s523 = scalar_lea.vmem [#allocation3], %s522
        %p524 = scmp.lt.s32.totalorder %s30, 1
        %s525 = scalar_select %p524, %s30, 1
        %p526 = scmp.lt.s32.totalorder %s31, 0
        %s527 = scalar_select %p526, %s31, 0
        %s528 = sadd.s32 %s527, %s525
        %s529 = smul.addr %s528, 4
        %s530 = scalar_lea.vmem %s0, %s529
        %p531 = scmp.lt.s32.totalorder %s30, 1
        %s532 = scalar_select %p531, %s30, 1
        %s533 = smul.addr %s532, 4
        %s534 = scalar_lea.vmem %s1, %s533
        %p535 = scmp.lt.s32.totalorder %s30, 1
        %s536 = scalar_select %p535, %s30, 1
        %s537 = smul.addr %s536, 4
        %s538 = scalar_lea.vmem %s2, %s537
        %p539 = scmp.lt.s32.totalorder %s32, 3
        %s540 = scalar_select %p539, %s32, 3
        %s541 = smul.addr %s540, 4
        %s542 = smul.addr %s541, 4
        %s543 = scalar_lea.vmem %s3, %s542
        %p544 = scmp.lt.s32.totalorder %s32, 3
        %s545 = scalar_select %p544, %s32, 3
        %s546 = smul.addr %s545, 4
        %s547 = smul.addr %s546, 4
        %s548 = scalar_lea.vmem %s4, %s547
        %p549 = scmp.lt.s32.totalorder %s32, 3
        %s550 = scalar_select %p549, %s32, 3
        %s551 = smul.addr %s550, 4
        %s552 = smul.addr %s551, 4
        %s553 = scalar_lea.vmem %s5, %s552
        %p554 = scmp.lt.s32.totalorder %s32, 3
        %s555 = scalar_select %p554, %s32, 3
        %s556 = smul.addr %s555, 4
        %s557 = scalar_lea.vmem %s6, %s556
        %p558 = scmp.lt.s32.totalorder %s32, 3
        %s559 = scalar_select %p558, %s32, 3
        %s560 = scalar_lea.vmem %s7, %s559
        %p561 = scmp.lt.s32.totalorder %s32, 3
        %s562 = scalar_select %p561, %s32, 3
        %s563 = scalar_lea.vmem %s8, %s562
        %p564 = scmp.lt.s32.totalorder %s32, 3
        %s565 = scalar_select %p564, %s32, 3
        %s566 = scalar_lea.vmem %s9, %s565
        %p568 = scmp.eq.s32.totalorder %s32, 0
        // Predicated region
        $region65: #{tpu_custom_call.1} parent=63 // pred_check
          %p569 = pneg %p568
        $region66: #{tpu_custom_call.1} parent=63 // pred_check_branch
          %571 = sbr.rel (%p569) target = $region68
        $region67: #{tpu_custom_call.1} parent=63 // pred_region
          %vm572 = vcmask 261120
          %573 = vst.msk [vmem:[#allocation2] sm:$0xff] %vm572, 0.0
        $region68: #{tpu_custom_call.1} parent=63 // pred_fallthru
          _
        %v574 = vld [vmem:[%s530] sm:$0xf]
        %v575 = vld [vmem:[%s534] sm:$0xf]
        %v576 = vld [vmem:[%s538] sm:$0xf]
        %v577 = vld [vmem:[%s543] sm:$0xf]
        %v578 = vld [vmem:[%s543 + $0x4] sm:$0xf]
        %v579 = vld [vmem:[%s543 + $0x8] sm:$0xf]
        %v580 = vld [vmem:[%s543 + $0xc] sm:$0xf]
        %v581 = vld [vmem:[%s560] sm:$0x1]
        %v583 = vlaneseq
        %v584 = vshrl.u32 %v583, 7
        %v585 = vsub.s32 0, %v584
        %v586 = vrot.slane %v581, %v585
        %v592 = vunpack.c.l.b16 %v577
        %v593 = vunpack.c.l.b16 %v578
        %v594 = vunpack.c.l.b16 %v579
        %v595 = vunpack.c.l.b16 %v580
        %v596 = vpack.c.b16 %v593, %v592
        %v597 = vpack.c.b16 %v595, %v594
        %vm600 = vcmask 261120
        %v602 = vsel %vm600, %v574, 0
        %604 = vmatprep.subr.bf16.mxu0 0
        %605 = vmatpush1.bf16.msra.mxu0 %v596
        %606 = vmatprep.subr.bf16.mxu0 0
        %607 = vmatpush1.bf16.msra.mxu0 %v597
        %608 = vmatprep.subr.bf16.mxu0 0
        %609 = vmatpush1.bf16.msra.mxu0 0
        %610 = vmatprep.subr.bf16.mxu0 0
        %611 = vmatpush1.bf16.msra.mxu0 0
        %612 = vmatprep.subr.bf16.mxu0 0
        %613 = vmatpush1.bf16.msra.mxu0 0
        %614 = vmatprep.subr.bf16.mxu0 0
        %615 = vmatpush1.bf16.msra.mxu0 0
        %616 = vmatprep.subr.bf16.mxu0 0
        %617 = vmatpush1.bf16.msra.mxu0 0
        %618 = vmatprep.subr.bf16.mxu0 0
        %619 = vmatpush1.bf16.msra.mxu0 0
        %620 = vmatprep.subr.bf16.mxu0 0
        %621 = vmatpush1.bf16.msra.mxu0 0
        %622 = vmatprep.subr.bf16.mxu0 0
        %623 = vmatpush1.bf16.msra.mxu0 0
        %624 = vmatprep.subr.bf16.mxu0 0
        %625 = vmatpush1.bf16.msra.mxu0 0
        %626 = vmatprep.subr.bf16.mxu0 0
        %627 = vmatpush1.bf16.msra.mxu0 0
        %628 = vmatprep.subr.bf16.mxu0 0
        %629 = vmatpush1.bf16.msra.mxu0 0
        %630 = vmatprep.subr.bf16.mxu0 0
        %631 = vmatpush1.bf16.msra.mxu0 0
        %632 = vmatprep.subr.bf16.mxu0 0
        %633 = vmatpush1.bf16.msra.mxu0 0
        %634 = vmatprep.subr.bf16.mxu0 0
        %635 = vmatpush1.bf16.msra.mxu0 0
        %636 = vmatprep.mubr.bf16.mxu0 0
        %637 = vmatmul.mubr.bf16.gmra.mrb[0].mxu0 %v602
        %v638 = vpop.f32.mrb[0].mxu0
        %v639 = vadd.f32 %v586, %v638
        %v640 = vpop.f32.mrb[0].mxu0
        %v641 = vpop.f32.mrb[0].mxu0
        %v642 = vpop.f32.mrb[0].mxu0
        %643 = vdwg.mxu0
        %v644 = vld [vmem:[%s548] sm:$0xf]
        %v645 = vld [vmem:[%s548 + $0x4] sm:$0xf]
        %v646 = vld [vmem:[%s548 + $0x8] sm:$0xf]
        %v647 = vld [vmem:[%s548 + $0xc] sm:$0xf]
        %v648 = vld [vmem:[%s563] sm:$0x1]
        %v650 = vlaneseq
        %v651 = vshrl.u32 %v650, 7
        %v652 = vsub.s32 0, %v651
        %v653 = vrot.slane %v648, %v652
        %v659 = vunpack.c.l.b16 %v644
        %v660 = vunpack.c.l.b16 %v645
        %v661 = vunpack.c.l.b16 %v646
        %v662 = vunpack.c.l.b16 %v647
        %v663 = vpack.c.b16 %v660, %v659
        %v664 = vpack.c.b16 %v662, %v661
        %v668 = vsel %vm600, %v575, 0
        %670 = vmatprep.subr.bf16.mxu0 0
        %671 = vmatpush1.bf16.msra.mxu0 %v663
        %672 = vmatprep.subr.bf16.mxu0 0
        %673 = vmatpush1.bf16.msra.mxu0 %v664
        %674 = vmatprep.subr.bf16.mxu0 0
        %675 = vmatpush1.bf16.msra.mxu0 0
        %676 = vmatprep.subr.bf16.mxu0 0
        %677 = vmatpush1.bf16.msra.mxu0 0
        %678 = vmatprep.subr.bf16.mxu0 0
        %679 = vmatpush1.bf16.msra.mxu0 0
        %680 = vmatprep.subr.bf16.mxu0 0
        %681 = vmatpush1.bf16.msra.mxu0 0
        %682 = vmatprep.subr.bf16.mxu0 0
        %683 = vmatpush1.bf16.msra.mxu0 0
        %684 = vmatprep.subr.bf16.mxu0 0
        %685 = vmatpush1.bf16.msra.mxu0 0
        %686 = vmatprep.subr.bf16.mxu0 0
        %687 = vmatpush1.bf16.msra.mxu0 0
        %688 = vmatprep.subr.bf16.mxu0 0
        %689 = vmatpush1.bf16.msra.mxu0 0
        %690 = vmatprep.subr.bf16.mxu0 0
        %691 = vmatpush1.bf16.msra.mxu0 0
        %692 = vmatprep.subr.bf16.mxu0 0
        %693 = vmatpush1.bf16.msra.mxu0 0
        %694 = vmatprep.subr.bf16.mxu0 0
        %695 = vmatpush1.bf16.msra.mxu0 0
        %696 = vmatprep.subr.bf16.mxu0 0
        %697 = vmatpush1.bf16.msra.mxu0 0
        %698 = vmatprep.subr.bf16.mxu0 0
        %699 = vmatpush1.bf16.msra.mxu0 0
        %700 = vmatprep.subr.bf16.mxu0 0
        %701 = vmatpush1.bf16.msra.mxu0 0
        %702 = vmatprep.mubr.bf16.mxu0 0
        %703 = vmatmul.mubr.bf16.gmra.mrb[0].mxu0 %v668
        %v704 = vpop.f32.mrb[0].mxu0
        %v705 = vadd.f32 %v653, %v704
        %v706 = vpop.f32.mrb[0].mxu0
        %v707 = vpop.f32.mrb[0].mxu0
        %v708 = vpop.f32.mrb[0].mxu0
        %709 = vdwg.mxu0
        %v710 = vld [vmem:[%s553] sm:$0xf]
        %v711 = vld [vmem:[%s553 + $0x4] sm:$0xf]
        %v712 = vld [vmem:[%s553 + $0x8] sm:$0xf]
        %v713 = vld [vmem:[%s553 + $0xc] sm:$0xf]
        %v714 = vld [vmem:[%s566] sm:$0x1]
        %v716 = vlaneseq
        %v717 = vshrl.u32 %v716, 7
        %v718 = vsub.s32 0, %v717
        %v719 = vrot.slane %v714, %v718
        %v725 = vunpack.c.l.b16 %v710
        %v726 = vunpack.c.l.b16 %v711
        %v727 = vunpack.c.l.b16 %v712
        %v728 = vunpack.c.l.b16 %v713
        %v729 = vpack.c.b16 %v726, %v725
        %v730 = vpack.c.b16 %v728, %v727
        %v734 = vsel %vm600, %v576, 0
        %736 = vmatprep.subr.bf16.mxu0 0
        %737 = vmatpush1.bf16.msra.mxu0 %v729
        %738 = vmatprep.subr.bf16.mxu0 0
        %739 = vmatpush1.bf16.msra.mxu0 %v730
        %740 = vmatprep.subr.bf16.mxu0 0
        %741 = vmatpush1.bf16.msra.mxu0 0
        %742 = vmatprep.subr.bf16.mxu0 0
        %743 = vmatpush1.bf16.msra.mxu0 0
        %744 = vmatprep.subr.bf16.mxu0 0
        %745 = vmatpush1.bf16.msra.mxu0 0
        %746 = vmatprep.subr.bf16.mxu0 0
        %747 = vmatpush1.bf16.msra.mxu0 0
        %748 = vmatprep.subr.bf16.mxu0 0
        %749 = vmatpush1.bf16.msra.mxu0 0
        %750 = vmatprep.subr.bf16.mxu0 0
        %751 = vmatpush1.bf16.msra.mxu0 0
        %752 = vmatprep.subr.bf16.mxu0 0
        %753 = vmatpush1.bf16.msra.mxu0 0
        %754 = vmatprep.subr.bf16.mxu0 0
        %755 = vmatpush1.bf16.msra.mxu0 0
        %756 = vmatprep.subr.bf16.mxu0 0
        %757 = vmatpush1.bf16.msra.mxu0 0
        %758 = vmatprep.subr.bf16.mxu0 0
        %759 = vmatpush1.bf16.msra.mxu0 0
        %760 = vmatprep.subr.bf16.mxu0 0
        %761 = vmatpush1.bf16.msra.mxu0 0
        %762 = vmatprep.subr.bf16.mxu0 0
        %763 = vmatpush1.bf16.msra.mxu0 0
        %764 = vmatprep.subr.bf16.mxu0 0
        %765 = vmatpush1.bf16.msra.mxu0 0
        %766 = vmatprep.subr.bf16.mxu0 0
        %767 = vmatpush1.bf16.msra.mxu0 0
        %768 = vmatprep.mubr.bf16.mxu0 0
        %769 = vmatmul.mubr.bf16.gmra.mrb[0].mxu0 %v734
        %v770 = vpop.f32.mrb[0].mxu0
        %v771 = vadd.f32 %v719, %v770
        %v772 = vpop.f32.mrb[0].mxu0
        %v773 = vpop.f32.mrb[0].mxu0
        %v774 = vpop.f32.mrb[0].mxu0
        %775 = vdwg.mxu0
        %v776 = vpack.c.bf16 %v639, %v639
        %v777 = vpack.c.bf16 %v705, %v705
        %vm778 = vcmask 64512
        %v780 = vsel %vm778, %v776, 0
        %v783 = vsel %vm778, %v777, 0
        %785 = vmatprep.subr.bf16.mxu0 0
        %786 = vmatpush1.bf16.xpose.msra.mxu0 %v783
        %787 = vmatprep.subr.bf16.mxu0 0
        %788 = vmatpush1.bf16.xpose.msra.mxu0 0
        %789 = vmatprep.subr.bf16.mxu0 0
        %790 = vmatpush1.bf16.xpose.msra.mxu0 0
        %791 = vmatprep.subr.bf16.mxu0 0
        %792 = vmatpush1.bf16.xpose.msra.mxu0 0
        %793 = vmatprep.subr.bf16.mxu0 0
        %794 = vmatpush1.bf16.xpose.msra.mxu0 0
        %795 = vmatprep.subr.bf16.mxu0 0
        %796 = vmatpush1.bf16.xpose.msra.mxu0 0
        %797 = vmatprep.subr.bf16.mxu0 0
        %798 = vmatpush1.bf16.xpose.msra.mxu0 0
        %799 = vmatprep.subr.bf16.mxu0 0
        %800 = vmatpush1.bf16.xpose.msra.mxu0 0
        %801 = vmatprep.subr.bf16.mxu0 0
        %802 = vmatpush1.bf16.xpose.msra.mxu0 0
        %803 = vmatprep.subr.bf16.mxu0 0
        %804 = vmatpush1.bf16.xpose.msra.mxu0 0
        %805 = vmatprep.subr.bf16.mxu0 0
        %806 = vmatpush1.bf16.xpose.msra.mxu0 0
        %807 = vmatprep.subr.bf16.mxu0 0
        %808 = vmatpush1.bf16.xpose.msra.mxu0 0
        %809 = vmatprep.subr.bf16.mxu0 0
        %810 = vmatpush1.bf16.xpose.msra.mxu0 0
        %811 = vmatprep.subr.bf16.mxu0 0
        %812 = vmatpush1.bf16.xpose.msra.mxu0 0
        %813 = vmatprep.subr.bf16.mxu0 0
        %814 = vmatpush1.bf16.xpose.msra.mxu0 0
        %815 = vmatprep.subr.bf16.mxu0 0
        %816 = vmatpush1.bf16.xpose.msra.mxu0 0
        %817 = vmatprep.mubr.bf16.mxu0 0
        %818 = vmatmul.mubr.bf16.gmra.mrb[0].mxu0 %v780
        %v819 = vpop.f32.mrb[0].mxu0
        %v820 = vadd.f32 0.0, %v819
        %v821 = vpop.f32.mrb[0].mxu0
        %v822 = vpop.f32.mrb[0].mxu0
        %v823 = vpop.f32.mrb[0].mxu0
        %824 = vdwg.mxu0
        %v825 = vsel %vm778, %v820, -inf
        %826 = vmax.xlane.f32.xlu0 %v825
        %v827 = vpop.xlane.xlu0 %826
        %v828 = vsub.f32 %v820, %v827
        %v829 = vmul.f32 %v828, 1.442695
        %v830 = vpow.pop %v829
        %v831 = vsel %vm778, %v830, 0.0
        %832 = vadd.xlane.f32.xlu0 %v831
        %v833 = vpop.xlane.xlu0 %832
        %v834 = vrcp.pop %v833
        %v835 = vpack.c.bf16 %v830, %v830
        %v836 = vpack.c.bf16 %v771, %v771
        %v838 = vsel %vm778, %v835, 0
        %vm840 = vcmask 1043456
        %v842 = vsel %vm840, %v836, 0
        %844 = vmatprep.subr.bf16.mxu0 0
        %845 = vmatpush1.bf16.msra.mxu0 %v842
        %846 = vmatprep.subr.bf16.mxu0 0
        %847 = vmatpush1.bf16.msra.mxu0 0
        %848 = vmatprep.subr.bf16.mxu0 0
        %849 = vmatpush1.bf16.msra.mxu0 0
        %850 = vmatprep.subr.bf16.mxu0 0
        %851 = vmatpush1.bf16.msra.mxu0 0
        %852 = vmatprep.subr.bf16.mxu0 0
        %853 = vmatpush1.bf16.msra.mxu0 0
        %854 = vmatprep.subr.bf16.mxu0 0
        %855 = vmatpush1.bf16.msra.mxu0 0
        %856 = vmatprep.subr.bf16.mxu0 0
        %857 = vmatpush1.bf16.msra.mxu0 0
        %858 = vmatprep.subr.bf16.mxu0 0
        %859 = vmatpush1.bf16.msra.mxu0 0
        %860 = vmatprep.subr.bf16.mxu0 0
        %861 = vmatpush1.bf16.msra.mxu0 0
        %862 = vmatprep.subr.bf16.mxu0 0
        %863 = vmatpush1.bf16.msra.mxu0 0
        %864 = vmatprep.subr.bf16.mxu0 0
        %865 = vmatpush1.bf16.msra.mxu0 0
        %866 = vmatprep.subr.bf16.mxu0 0
        %867 = vmatpush1.bf16.msra.mxu0 0
        %868 = vmatprep.subr.bf16.mxu0 0
        %869 = vmatpush1.bf16.msra.mxu0 0
        %870 = vmatprep.subr.bf16.mxu0 0
        %871 = vmatpush1.bf16.msra.mxu0 0
        %872 = vmatprep.subr.bf16.mxu0 0
        %873 = vmatpush1.bf16.msra.mxu0 0
        %874 = vmatprep.subr.bf16.mxu0 0
        %875 = vmatpush1.bf16.msra.mxu0 0
        %876 = vmatprep.mubr.bf16.mxu0 0
        %877 = vmatmul.mubr.bf16.gmra.mrb[0].mxu0 %v838
        %v878 = vpop.f32.mrb[0].mxu0
        %v879 = vadd.f32 0.0, %v878
        %v880 = vpop.f32.mrb[0].mxu0
        %v881 = vpop.f32.mrb[0].mxu0
        %v882 = vpop.f32.mrb[0].mxu0
        %883 = vdwg.mxu0
        %v884 = vmul.f32 %v879, %v834
        %v885 = vld [vmem:[#allocation2] sm:$0xff]
        %v886 = vpack.c.bf16 %v884, %v884
        %v887 = vld [vmem:[%s557] sm:$0xf]
        %v889 = vsel %vm778, %v886, 0
        %v892 = vsel %vm840, %v887, 0
        %894 = vmatprep.subr.bf16.mxu0 0
        %895 = vmatpush1.bf16.msra.mxu0 %v892
        %896 = vmatprep.subr.bf16.mxu0 0
        %897 = vmatpush1.bf16.msra.mxu0 0
        %898 = vmatprep.subr.bf16.mxu0 0
        %899 = vmatpush1.bf16.msra.mxu0 0
        %900 = vmatprep.subr.bf16.mxu0 0
        %901 = vmatpush1.bf16.msra.mxu0 0
        %902 = vmatprep.subr.bf16.mxu0 0
        %903 = vmatpush1.bf16.msra.mxu0 0
        %904 = vmatprep.subr.bf16.mxu0 0
        %905 = vmatpush1.bf16.msra.mxu0 0
        %906 = vmatprep.subr.bf16.mxu0 0
        %907 = vmatpush1.bf16.msra.mxu0 0
        %908 = vmatprep.subr.bf16.mxu0 0
        %909 = vmatpush1.bf16.msra.mxu0 0
        %910 = vmatprep.subr.bf16.mxu0 0
        %911 = vmatpush1.bf16.msra.mxu0 0
        %912 = vmatprep.subr.bf16.mxu0 0
        %913 = vmatpush1.bf16.msra.mxu0 0
        %914 = vmatprep.subr.bf16.mxu0 0
        %915 = vmatpush1.bf16.msra.mxu0 0
        %916 = vmatprep.subr.bf16.mxu0 0
        %917 = vmatpush1.bf16.msra.mxu0 0
        %918 = vmatprep.subr.bf16.mxu0 0
        %919 = vmatpush1.bf16.msra.mxu0 0
        %920 = vmatprep.subr.bf16.mxu0 0
        %921 = vmatpush1.bf16.msra.mxu0 0
        %922 = vmatprep.subr.bf16.mxu0 0
        %923 = vmatpush1.bf16.msra.mxu0 0
        %924 = vmatprep.subr.bf16.mxu0 0
        %925 = vmatpush1.bf16.msra.mxu0 0
        %926 = vmatprep.mubr.bf16.mxu0 0
        %927 = vmatmul.mubr.bf16.gmra.mrb[0].mxu0 %v889
        %v928 = vpop.f32.mrb[0].mxu0
        %v929 = vadd.f32 0.0, %v928
        %v930 = vpop.f32.mrb[0].mxu0
        %v931 = vpop.f32.mrb[0].mxu0
        %v932 = vpop.f32.mrb[0].mxu0
        %933 = vdwg.mxu0
        %v934 = vadd.f32 %v885, %v929
        %935 = vst.msk [vmem:[#allocation2] sm:$0xff] %vm600, %v934
        %p936 = scmp.eq.s32.totalorder %s32, 3
        // Predicated region
        $region69: #{tpu_custom_call.1} parent=63 // pred_check
          %p937 = pneg %p936
        $region70: #{tpu_custom_call.1} parent=63 // pred_check_branch
          %939 = sbr.rel (%p937) target = $region72
        $region71: #{tpu_custom_call.1} parent=63 // pred_region
          %v940 = vld [vmem:[#allocation2] sm:$0xff]
          %v941 = vld [vmem:[%s10] sm:$0x1]
          %v943 = vlaneseq
          %v944 = vshrl.u32 %v943, 7
          %v945 = vsub.s32 0, %v944
          %v946 = vrot.slane %v941, %v945
          %v948 = vadd.f32 %v940, %v946
          %949 = vst.msk [vmem:[%s523] sm:$0xff] %vm600, %v948
        $region72: #{tpu_custom_call.1} parent=63 // pred_fallthru
          _
        %s950 = sand.u32 %s337, 1
        %s951 = scalar_lea.sflag [#allocation4], %s950
        %s952 = sand.u32 %s337, 1
        %s953 = smul.addr %s952, 8
        %s954 = scalar_lea.vmem [#allocation3], %s953
        // Predicated region
        $region73: #{tpu_custom_call.1} parent=63 // pred_check
          %p955 = pneg %p347
        $region74: #{tpu_custom_call.1} parent=63 // pred_check_branch
          %957 = sbr.rel (%p955) target = $region76
        $region75: #{tpu_custom_call.1} parent=63 // pred_region
          %s959 = ssub.s32 128, 128
          %960 = vsyncadd %s951, %s959
          %s961 = sadd.s32 %s31, %s30
          %s962 = smul.addr %s961, 128
          %s963 = scalar_lea.hbm %s11, %s962
          %s965 = sshll.u32 %s954, 4
          %s966 = int_to_ptr.vmem [resolvable:$true] %s965
          %968 = dma.vmem_to_hbm [thread:$0]  %s966, 128, %s963, %s951
        $region76: #{tpu_custom_call.1} parent=63 // pred_fallthru
          _
      $region64: #{tpu_custom_call.1} parent=5 // pred_fallthru
        _
      %p969 = scmp.le.s32.totalorder 2, %s20
      // Predicated region
      $region77: #{tpu_custom_call.1} parent=5 // pred_check
        %p970 = pneg %p969
      $region78: #{tpu_custom_call.1} parent=5 // pred_check_branch
        %972 = sbr.rel (%p970) target = $region80
      $region79: #{tpu_custom_call.1} parent=5 // pred_region
        %s973 = ssub.s32 %s20, 2
        // Predicated region
        $region81: #{tpu_custom_call.1} parent=79 // pred_check
          %p974 = pneg %p353
        $region82: #{tpu_custom_call.1} parent=79 // pred_check_branch
          %976 = sbr.rel (%p974) target = $region84
        $region83: #{tpu_custom_call.1} parent=79 // pred_region
          %s977 = sand.u32 %s338, 1
          %s978 = scalar_lea.sflag [#allocation4], %s977
          %s979 = sand.u32 %s338, 1
          %s980 = smul.addr %s979, 8
          %s981 = scalar_lea.vmem [#allocation3], %s980
          %982 = dma.done %s978, 128
        $region84: #{tpu_custom_call.1} parent=79 // pred_fallthru
          _
      $region80: #{tpu_custom_call.1} parent=5 // pred_fallthru
        _
    $region6: #{tpu_custom_call.1} parent=1 // loop_footer
      %s24 = sadd.s32 1, %s20
    $region7: #{tpu_custom_call.1} parent=1 // loop_footer_branch
      %19 = sbr.rel target = $region3
    $region8: #{tpu_custom_call.1} parent=1 // loop_exit
      _
    %983 = vsyncpa [#allocation4], 1
    %s984 = scalar_lea.sflag [#allocation4], 1
    %985 = vsyncpa %s984, 1

</llo_original>
